<compile_context>
chip_gen: v6e
topology: v6e:2x2x1
jax: 0.10.0
libtpu: 0.0.40
codegen_flags: <defaults>
</compile_context>

<pallas_src>
import functools

import jax
import jax.numpy as jnp
import numpy as np
from jax.experimental import pallas as pl
from jax.experimental.pallas import tpu as pltpu


# ----------------------------------------------------------------------------
# Parameter construction (deterministic): Hadamard-based hash targets,
# same as CSQLoss.get_hash_targets for n_class <= 2*bit.
# ----------------------------------------------------------------------------
def _hadamard(n: int) -> np.ndarray:
    # Sylvester construction; n must be a power of two.
    assert n > 0 and (n & (n - 1)) == 0, "bit must be a power of two"
    H = np.array([[1.0]], dtype=np.float64)
    while H.shape[0] < n:
        H = np.block([[H, H], [H, -H]])
    return H


def get_hash_targets(n_class: int, bit: int) -> np.ndarray:
    H_K = _hadamard(bit)
    H_2K = np.concatenate((H_K, -H_K), 0)
    assert H_2K.shape[0] >= n_class, "resize path not needed for this config"
    return H_2K[:n_class].astype(np.float32)


def _round_up(x: int, m: int) -> int:
    return ((x + m - 1) // m) * m


# ----------------------------------------------------------------------------
# Pallas kernel
# ----------------------------------------------------------------------------
def _csq_loss_kernel(u_ref, y_ref, htT_ref, out_ref, *scratch, lam: float,
                     batch: int, tile_b: int, num_tiles: int,
                     assume_one_hot: bool):
    i = pl.program_id(0)                               # batch-tile axis

    u = jnp.tanh(u_ref[...].astype(jnp.float32))       # (bit, TILE_B) lane-dense
    y = y_ref[...].astype(jnp.float32)                 # (C,   TILE_B)
    htT_bf16 = htT_ref[...].astype(jnp.bfloat16)       # (bit, C), exact (+-1)

    C, TB = y.shape

    if assume_one_hot:
        # Strict one-hot labels: the row gather IS the matmul htT @ y
        # (exact in bf16: operands are 0/1 and +-1, accumulation in f32).
        hash_center = jnp.dot(htT_bf16, y.astype(jnp.bfloat16),
                              preferred_element_type=jnp.float32)
    else:
        # torch.argmax semantics (lowest index on ties) for non-strict labels,
        # realized as a one-hot so the gather is one lane-dense MXU matmul.
        cls_iota = jax.lax.broadcasted_iota(jnp.int32, (C, TB), 0)
        y_max = jnp.max(y, axis=0, keepdims=True)
        idx = jnp.min(jnp.where(y >= y_max, cls_iota, C), axis=0, keepdims=True)
        onehot = (cls_iota == idx).astype(jnp.bfloat16)
        hash_center = jnp.dot(htT_bf16, onehot,
                              preferred_element_type=jnp.float32)

    # center loss: BCE(0.5*(u+1), 0.5*(hash_center+1)) with PyTorch's -100 log
    # clamp.  hash_center is exactly +-1, so the target is 0/1 and only one log
    # branch is ever live -> a single selected log per element.
    p = 0.5 * (u + 1.0)
    arg = jnp.where(hash_center > 0.0, p, 1.0 - p)
    bce = -jnp.maximum(jnp.log(arg), -100.0)

    # Q loss term: (|u| - 1)^2.  Both terms share the same 1/(B*bit) mean, so
    # lam folds in here and the divide happens once in the wrapper.
    d = jnp.abs(u) - 1.0
    loss = bce + lam * (d * d)                          # (bit, TILE_B)

    # Reduce over the bit (sublane) axis first so masking / accumulation only
    # touch a (1, TILE_B) row.
    per_col = jnp.sum(loss, axis=0, keepdims=True)      # (1, TILE_B)

    if num_tiles * tile_b != batch:
        # Padding exists; zero padded lane columns (cheap after the reduce).
        col = i * tile_b + jax.lax.broadcasted_iota(jnp.int32, (1, TB), 1)
        per_col = jnp.where(col < batch, per_col, 0.0)

    if num_tiles == 1:
        # Collapsed grid: straight-line body, no accumulator machinery.
        out_ref[...] = jnp.full(out_ref.shape, jnp.sum(per_col), jnp.float32)
    else:
        acc_ref, = scratch                              # (1, TILE_B) f32

        @pl.when(i == 0)
        def _init():
            acc_ref[...] = jnp.zeros_like(acc_ref)

        acc_ref[...] += per_col

        @pl.when(i == num_tiles - 1)
        def _finalize():
            out_ref[...] = jnp.full(out_ref.shape, jnp.sum(acc_ref[...]),
                                    jnp.float32)


def csq_loss(u: jax.Array, y: jax.Array, hash_targets: jax.Array, lam: float,
             *, max_tile_b: int = 2048,
             assume_one_hot: bool = True) -> jax.Array:
    """CSQ loss forward (single-label). Returns a float32 scalar."""
    B, bit = u.shape
    B2, C = y.shape
    n_class, bit2 = hash_targets.shape
    assert B == B2 and bit == bit2 and C == n_class

    # Lane-dense layout: batch on the lane (last) axis. Pure layout plumbing.
    # TODO(synk): for large-B deployments, produce u/y in (bit, B)/(C, B)
    # layout upstream to remove these extra HBM round trips.
    u_t = jnp.transpose(u)               # (bit, B)
    y_t = jnp.transpose(y)               # (C, B)
    ht_t = jnp.transpose(hash_targets)   # (bit, C)

    # One grid step for small/medium B; cap the tile at max_tile_b for huge B.
    tile_b = min(_round_up(B, 128), max_tile_b)
    num_tiles = (B + tile_b - 1) // tile_b
    b_pad = num_tiles * tile_b
    if b_pad != B:
        pad = b_pad - B
        u_t = jnp.pad(u_t, ((0, 0), (0, pad)))
        y_t = jnp.pad(y_t, ((0, 0), (0, pad)))

    kernel = functools.partial(_csq_loss_kernel, lam=float(lam), batch=B,
                               tile_b=tile_b, num_tiles=num_tiles,
                               assume_one_hot=assume_one_hot)

    flops = 2 * b_pad * C * bit + 12 * b_pad * bit
    transcendentals = 2 * b_pad * bit            # tanh + one selected log
    bytes_accessed = 4 * (b_pad * bit + b_pad * C + bit * C + 8 * 128)

    scratch_shapes = ([] if num_tiles == 1
                      else [pltpu.VMEM((1, tile_b), jnp.float32)])

    out = pl.pallas_call(
        kernel,
        out_shape=jax.ShapeDtypeStruct((8, 128), jnp.float32),
        grid_spec=pltpu.PrefetchScalarGridSpec(
            num_scalar_prefetch=0,
            grid=(num_tiles,),
            in_specs=[
                # u_t: (bit, B_pad) -> (bit, TILE_B) tiles along the lane axis
                pl.BlockSpec((bit, tile_b), lambda i: (0, i)),
                # y_t: (C, B_pad) -> (C, TILE_B) tiles
                pl.BlockSpec((C, tile_b), lambda i: (0, i)),
                # hash_targets^T: small, resident across the whole grid
                pl.BlockSpec((bit, C), lambda i: (0, 0)),
            ],
            # single lane-dense partial-sum block, resident across the grid
            out_specs=pl.BlockSpec((8, 128), lambda i: (0, 0)),
            scratch_shapes=scratch_shapes,
        ),
        compiler_params=pltpu.CompilerParams(
            dimension_semantics=("arbitrary",)),
        cost_estimate=pl.CostEstimate(flops=flops,
                                      transcendentals=transcendentals,
                                      bytes_accessed=bytes_accessed),
    )(u_t, y_t, ht_t)

    return out[0, 0] / jnp.float32(B * bit)


# ----------------------------------------------------------------------------
# Pure-JAX reference (for a correctness sanity check)
# ----------------------------------------------------------------------------
def csq_loss_ref(u, y, hash_targets, lam):
    u = jnp.tanh(u.astype(jnp.float32))
    hash_center = hash_targets[jnp.argmax(y, axis=1)]
    p = 0.5 * (u + 1.0)
    t = 0.5 * (hash_center + 1.0)
    log_p = jnp.maximum(jnp.log(p), -100.0)
    log_1mp = jnp.maximum(jnp.log(1.0 - p), -100.0)
    center_loss = jnp.mean(-(t * log_p + (1.0 - t) * log_1mp))
    q_loss = jnp.mean((jnp.abs(u) - 1.0) ** 2)
    return center_loss + lam * q_loss


if __name__ == "__main__":
    # Config consistent with the module: bit=32 hash code, 16 classes,
    # single-label (one-hot y), lambda from config.  batch=300 exercises the
    # padding/mask path (tile_b=384, 84 padded lanes) in a single grid step.
    batch, bit, n_class = 300, 32, 16
    lam = 0.0001

    hash_targets = jnp.asarray(get_hash_targets(n_class, bit))  # (16, 32)

    key = jax.random.PRNGKey(0)
    ku, ky = jax.random.split(key)
    u = jax.random.normal(ku, (batch, bit), dtype=jnp.float32)  # network outputs
    labels = jax.random.randint(ky, (batch,), 0, n_class)
    y = jax.nn.one_hot(labels, n_class, dtype=jnp.float32)      # (300, 16)

    ref = jax.block_until_ready(csq_loss_ref(u, y, hash_targets, lam))

    # Single-step grid, strict one-hot fast path (default).
    loss = jax.block_until_ready(csq_loss(u, y, hash_targets, lam))
    # argmax-based gather path (non-strict single-label targets).
    loss_argmax = jax.block_until_ready(
        csq_loss(u, y, hash_targets, lam, assume_one_hot=False))
    # Multi-tile accumulator path (forces 3 grid steps of tile_b=128).
    loss_multitile = jax.block_until_ready(
        csq_loss(u, y, hash_targets, lam, max_tile_b=128))

    for v in (loss, loss_argmax, loss_multitile):
        assert jnp.isfinite(v), "loss is not finite"
        assert jnp.allclose(v, ref, rtol=1e-4, atol=1e-4), (v, ref)

    print("KERNEL_OK")
</pallas_src>

<mosaic_0001>
module attributes {stable_mosaic.version = 11 : i64} {
  func.func @_csq_loss_kernel(%arg0: i32, %arg1: memref<32x384xf32, #tpu.memory_space<vmem>>, %arg2: memref<16x384xf32, #tpu.memory_space<vmem>>, %arg3: memref<32x16xf32, #tpu.memory_space<vmem>>, %arg4: memref<8x128xf32, #tpu.memory_space<vmem>>) attributes {dimension_semantics = [#tpu.dimension_semantics<arbitrary>], iteration_bounds = array<i64: 1>, scalar_prefetch = 0 : i64, scratch_operands = 0 : i64, tpu.core_type = #tpu.core_type<tc>, window_params = [{transform_indices = @transform_0, window_bounds = array<i64: 32, 384>}, {transform_indices = @transform_1, window_bounds = array<i64: 16, 384>}, {pipeline_mode = #tpu.pipeline_mode<synchronous>, transform_indices = @transform_2, window_bounds = array<i64: 32, 16>}, {pipeline_mode = #tpu.pipeline_mode<synchronous>, transform_indices = @transform_3, window_bounds = array<i64: 8, 128>}]} {
    %c0 = arith.constant 0 : index
    %c0_0 = arith.constant 0 : index
    %0 = vector.load %arg1[%c0, %c0_0] : memref<32x384xf32, #tpu.memory_space<vmem>>, vector<32x384xf32>
    %1 = math.tanh %0 : vector<32x384xf32>
    %c0_1 = arith.constant 0 : index
    %c0_2 = arith.constant 0 : index
    %2 = vector.load %arg2[%c0_1, %c0_2] : memref<16x384xf32, #tpu.memory_space<vmem>>, vector<16x384xf32>
    %c0_3 = arith.constant 0 : index
    %c0_4 = arith.constant 0 : index
    %3 = vector.load %arg3[%c0_3, %c0_4] : memref<32x16xf32, #tpu.memory_space<vmem>>, vector<32x16xf32>
    %4 = arith.truncf %3 : vector<32x16xf32> to vector<32x16xbf16>
    %5 = arith.truncf %2 : vector<16x384xf32> to vector<16x384xbf16>
    %cst = arith.constant dense<0.000000e+00> : vector<32x384xf32>
    %6 = tpu.matmul %4, %5, %cst {dimension_numbers = #tpu.dot_dimension_numbers<[1], [0], [0], [1], [0, 0, 1, 1], [], []>} : vector<32x16xbf16>, vector<16x384xbf16>, vector<32x384xf32> -> vector<32x384xf32>
    %cst_5 = arith.constant 1.000000e+00 : f32
    %7 = vector.broadcast %cst_5 : f32 to vector<32x384xf32>
    %8 = arith.addf %1, %7 : vector<32x384xf32>
    %cst_6 = arith.constant 5.000000e-01 : f32
    %9 = vector.broadcast %cst_6 : f32 to vector<32x384xf32>
    %10 = arith.mulf %9, %8 : vector<32x384xf32>
    %cst_7 = arith.constant 0.000000e+00 : f32
    %11 = vector.broadcast %cst_7 : f32 to vector<32x384xf32>
    %12 = arith.cmpf ogt, %6, %11 : vector<32x384xf32>
    %cst_8 = arith.constant 1.000000e+00 : f32
    %13 = vector.broadcast %cst_8 : f32 to vector<32x384xf32>
    %14 = arith.subf %13, %10 : vector<32x384xf32>
    %15 = arith.select %12, %10, %14 : vector<32x384xi1>, vector<32x384xf32>
    %16 = math.log %15 : vector<32x384xf32>
    %cst_9 = arith.constant -1.000000e+02 : f32
    %17 = vector.broadcast %cst_9 : f32 to vector<32x384xf32>
    %18 = arith.maximumf %16, %17 : vector<32x384xf32>
    %cst_10 = arith.constant 0.000000e+00 : f32
    %19 = vector.broadcast %cst_10 : f32 to vector<32x384xf32>
    %20 = arith.subf %19, %18 : vector<32x384xf32>
    %21 = math.absf %1 : vector<32x384xf32>
    %cst_11 = arith.constant 1.000000e+00 : f32
    %22 = vector.broadcast %cst_11 : f32 to vector<32x384xf32>
    %23 = arith.subf %21, %22 : vector<32x384xf32>
    %24 = arith.mulf %23, %23 : vector<32x384xf32>
    %cst_12 = arith.constant 9.99999974E-5 : f32
    %25 = vector.broadcast %cst_12 : f32 to vector<32x384xf32>
    %26 = arith.mulf %25, %24 : vector<32x384xf32>
    %27 = arith.addf %20, %26 : vector<32x384xf32>
    %cst_13 = arith.constant dense<0.000000e+00> : vector<384xf32>
    %28 = vector.multi_reduction <add>, %27, %cst_13 [0] : vector<32x384xf32> to vector<384xf32>
    %29 = vector.shape_cast %28 : vector<384xf32> to vector<1x384xf32>
    %c384_i32 = arith.constant 384 : i32
    %30 = arith.muli %arg0, %c384_i32 : i32
    %31 = tpu.iota {dimensions = array<i32: 1>} : vector<1x384xi32>
    %32 = vector.broadcast %30 : i32 to vector<1x384xi32>
    %33 = arith.addi %32, %31 : vector<1x384xi32>
    %c300_i32 = arith.constant 300 : i32
    %34 = vector.broadcast %c300_i32 : i32 to vector<1x384xi32>
    %35 = arith.cmpi slt, %33, %34 : vector<1x384xi32>
    %cst_14 = arith.constant 0.000000e+00 : f32
    %36 = vector.broadcast %cst_14 : f32 to vector<1x384xf32>
    %37 = arith.select %35, %29, %36 : vector<1x384xi1>, vector<1x384xf32>
    %38 = vector.shape_cast %37 : vector<1x384xf32> to vector<1x1x384xf32>
    %cst_15 = arith.constant dense<0.000000e+00> : vector<1xf32>
    %39 = vector.multi_reduction <add>, %38, %cst_15 [1, 2] : vector<1x1x384xf32> to vector<1xf32>
    %40 = vector.shape_cast %39 : vector<1xf32> to vector<1x1x1xf32>
    %41 = vector.extract %40[0, 0, 0] : f32 from vector<1x1x1xf32>
    %42 = vector.broadcast %41 : f32 to vector<8x128xf32>
    %c0_16 = arith.constant 0 : index
    %c0_17 = arith.constant 0 : index
    %43 = vector.load %arg4[%c0_16, %c0_17] : memref<8x128xf32, #tpu.memory_space<vmem>>, vector<8x128xf32>
    tpu.vector_store %arg4[%c0_16, %c0_17], %42 {strides = array<i32>} : memref<8x128xf32, #tpu.memory_space<vmem>>, vector<8x128xf32>,
    return
  }
  func.func @transform_0(%arg0: i32) -> (i32, i32) {
    %c0_i32 = arith.constant 0 : i32
    %c0_i32_0 = arith.constant 0 : i32
    return %c0_i32, %arg0 : i32, i32
  }
  func.func @transform_1(%arg0: i32) -> (i32, i32) {
    %c0_i32 = arith.constant 0 : i32
    %c0_i32_0 = arith.constant 0 : i32
    return %c0_i32, %arg0 : i32, i32
  }
  func.func @transform_2(%arg0: i32) -> (i32, i32) {
    %c0_i32 = arith.constant 0 : i32
    %c0_i32_0 = arith.constant 0 : i32
    %c0_i32_1 = arith.constant 0 : i32
    return %c0_i32, %c0_i32_0 : i32, i32
  }
  func.func @transform_3(%arg0: i32) -> (i32, i32) {
    %c0_i32 = arith.constant 0 : i32
    %c0_i32_0 = arith.constant 0 : i32
    %c0_i32_1 = arith.constant 0 : i32
    return %c0_i32, %c0_i32_0 : i32, i32
  }
}

</mosaic_0001>

<llo_original>
// kernel: tpu_custom_call.1
$region0: #{tpu_custom_call.1}
  #allocation0 [shape = 'u32[]', space=smem, size = 0x4, offset = 0x4, fixed_abs, tag = 'smem constant byte address 0x4 - core index']
  #allocation1 [shape = 'u32[144,128]{1,0:T(1,128)}', space=vmem, size = 0x12000, scoped, tag = 'internal scratch']
  %s0 = inlined_call_operand.hbm [shape: f32[32,384], index: 0, kind: input, shape index: {}]
  %s1 = inlined_call_operand.vmem [shape: f32[16,384], index: 1, kind: input, shape index: {}]
  %s2 = inlined_call_operand.vmem [shape: f32[32,16], index: 2, kind: input, shape index: {}]
  %s3 = inlined_call_operand.hbm [shape: f32[8,128], index: 3, kind: output, shape index: {}]
  %s4 = sld [smem:[#allocation0]]
  $region26: #{tpu_custom_call.1} parent=0
    _
  %s6 = ssub.s32 1, %s4
  %s7 = scalar_select 0, %s6, %s4
  $region1: #{tpu_custom_call.1} parent=0
    #allocation2 [shape = 'u8[49152]{0}', space=vmem, size = 0xc000, scoped, tag = 'input window, operand 0, single buffered']
    #allocation3 [shape = 's32[1]{0}', space=sflag, size = 0x4, scoped, tag = 'scoped memory for tpu_custom_call.1']
    #allocation4 [shape = 's32[1]{0}', space=sflag, size = 0x4, scoped, tag = 'scoped memory for tpu_custom_call.1']
    #allocation5 [shape = 'u8[4096]{0}', space=vmem, size = 0x1000, scoped, tag = 'output window, operand 0, single buffered']
    %8 = vsyncpa [#allocation3], 0
    %9 = vsyncpa [#allocation4], 0
    // Predicated region
    $region2: #{tpu_custom_call.1} parent=1 // pred_check
      _
    $region3: #{tpu_custom_call.1} parent=1 // pred_check_branch
      %11 = sbr.rel (0) target = $region5
    $region4: #{tpu_custom_call.1} parent=1 // pred_region
      %s13 = ssub.s32 1536, 1536
      %14 = vsyncadd [#allocation3], %s13
      %s15 = sshll.u32 [#allocation2], 4
      %s16 = int_to_ptr.vmem [resolvable:$true] %s15
      %21 = dma.hbm_to_vmem [thread:$0]  %s0, 1536, %s16, [#allocation3], 384, 384, 24
    $region5: #{tpu_custom_call.1} parent=1 // pred_fallthru
      _
    // Predicated region
    $region6: #{tpu_custom_call.1} parent=1 // pred_check
      _
    $region7: #{tpu_custom_call.1} parent=1 // pred_check_branch
      %23 = sbr.rel (0) target = $region9
    $region8: #{tpu_custom_call.1} parent=1 // pred_region
      _
    $region9: #{tpu_custom_call.1} parent=1 // pred_fallthru
      _
    // Predicated region
    $region10: #{tpu_custom_call.1} parent=1 // pred_check
      _
    $region11: #{tpu_custom_call.1} parent=1 // pred_check_branch
      %25 = sbr.rel (0) target = $region13
    $region12: #{tpu_custom_call.1} parent=1 // pred_region
      _
    $region13: #{tpu_custom_call.1} parent=1 // pred_fallthru
      _
    // Predicated region
    $region14: #{tpu_custom_call.1} parent=1 // pred_check
      _
    $region15: #{tpu_custom_call.1} parent=1 // pred_check_branch
      %27 = sbr.rel (0) target = $region17
    $region16: #{tpu_custom_call.1} parent=1 // pred_region
      %28 = dma.done [#allocation3], 1536
    $region17: #{tpu_custom_call.1} parent=1 // pred_fallthru
      _
    %v30 = vld [vmem:[#allocation2] sm:$0xff]
    %v31 = vld [vmem:[#allocation2 + $0x8] sm:$0xff]
    %v32 = vld [vmem:[#allocation2 + $0x10] sm:$0xff]
    %v33 = vld [vmem:[#allocation2 + $0x18] sm:$0xff]
    %v34 = vld [vmem:[#allocation2 + $0x20] sm:$0xff]
    %v35 = vld [vmem:[#allocation2 + $0x28] sm:$0xff]
    %v36 = vld [vmem:[#allocation2 + $0x30] sm:$0xff]
    %v37 = vld [vmem:[#allocation2 + $0x38] sm:$0xff]
    %v38 = vld [vmem:[#allocation2 + $0x40] sm:$0xff]
    %v39 = vld [vmem:[#allocation2 + $0x48] sm:$0xff]
    %v40 = vld [vmem:[#allocation2 + $0x50] sm:$0xff]
    %v41 = vld [vmem:[#allocation2 + $0x58] sm:$0xff]
    %v42 = vtanh.pop %v30
    %v43 = vtanh.pop %v31
    %v44 = vtanh.pop %v32
    %v45 = vtanh.pop %v33
    %v46 = vtanh.pop %v34
    %v47 = vtanh.pop %v35
    %v48 = vtanh.pop %v36
    %v49 = vtanh.pop %v37
    %v50 = vtanh.pop %v38
    %v51 = vtanh.pop %v39
    %v52 = vtanh.pop %v40
    %v53 = vtanh.pop %v41
    %v54 = vld [vmem:[%s1] sm:$0xff]
    %v55 = vld [vmem:[%s1 + $0x8] sm:$0xff]
    %v56 = vld [vmem:[%s1 + $0x10] sm:$0xff]
    %v57 = vld [vmem:[%s1 + $0x18] sm:$0xff]
    %v58 = vld [vmem:[%s1 + $0x20] sm:$0xff]
    %v59 = vld [vmem:[%s1 + $0x28] sm:$0xff]
    %v60 = vld [vmem:[%s2] sm:$0xff]
    %v61 = vld [vmem:[%s2 + $0x8] sm:$0xff]
    %v62 = vld [vmem:[%s2 + $0x10] sm:$0xff]
    %v63 = vld [vmem:[%s2 + $0x18] sm:$0xff]
    %v64 = vpack.c.bf16 %v61, %v60
    %v65 = vpack.c.bf16 %v63, %v62
    %v66 = vpack.c.bf16 %v57, %v54
    %v67 = vpack.c.bf16 %v58, %v55
    %v68 = vpack.c.bf16 %v59, %v56
    %vm69 = vcmask 130048
    %v71 = vsel %vm69, %v64, 0
    %v74 = vsel %vm69, %v65, 0
    %76 = vmatprep.subr.bf16.mxu0 0
    %77 = vmatpush1.bf16.msra.mxu0 0
    %78 = vmatprep.subr.bf16.mxu0 0
    %79 = vmatpush1.bf16.msra.mxu0 0
    %80 = vmatprep.subr.bf16.mxu0 0
    %81 = vmatpush1.bf16.msra.mxu0 0
    %82 = vmatprep.subr.bf16.mxu0 0
    %83 = vmatpush1.bf16.msra.mxu0 0
    %84 = vmatprep.subr.bf16.mxu0 0
    %85 = vmatpush1.bf16.msra.mxu0 0
    %86 = vmatprep.subr.bf16.mxu0 0
    %87 = vmatpush1.bf16.msra.mxu0 0
    %88 = vmatprep.subr.bf16.mxu0 0
    %89 = vmatpush1.bf16.msra.mxu0 0
    %90 = vmatprep.subr.bf16.mxu0 %v67
    %91 = vmatpush1.bf16.msra.mxu0 %v66
    %92 = vmatprep.subr.bf16.mxu0 0
    %93 = vmatpush2.bf16.msra.mxu0 0
    %94 = vmatprep.subr.bf16.mxu0 0
    %95 = vmatpush2.bf16.msra.mxu0 0
    %96 = vmatprep.subr.bf16.mxu0 0
    %97 = vmatpush2.bf16.msra.mxu0 0
    %98 = vmatprep.subr.bf16.mxu0 0
    %99 = vmatpush2.bf16.msra.mxu0 0
    %100 = vmatprep.subr.bf16.mxu0 0
    %101 = vmatpush2.bf16.msra.mxu0 0
    %102 = vmatprep.subr.bf16.mxu0 0
    %103 = vmatpush2.bf16.msra.mxu0 0
    %104 = vmatprep.subr.bf16.mxu0 0
    %105 = vmatpush2.bf16.msra.mxu0 0
    %106 = vmatprep.subr.bf16.mxu0 0
    %107 = vmatpush2.bf16.msra.mxu0 0
    %108 = vmatprep.mubr.bf16.mxu0 0
    %109 = vmatmul.mubr.bf16.gmra.mxu0 %v71
    %v110 = vpop.f32.mrf.mxu0
    %v111 = vadd.f32 0.0, %v110
    %v112 = vpop.f32.mrf.mxu0
    %v113 = vadd.f32 0.0, %v112
    %v114 = vpop.f32.mrf.mxu0
    %v115 = vadd.f32 0.0, %v114
    %v116 = vpop.f32.mrf.mxu0
    %v117 = vadd.f32 0.0, %v116
    %118 = vmatprep.mubr.bf16.mxu0 0
    %119 = vmatmul.mubr.bf16.gmra.mxu0 %v74
    %v120 = vpop.f32.mrf.mxu0
    %v121 = vadd.f32 0.0, %v120
    %v122 = vpop.f32.mrf.mxu0
    %v123 = vadd.f32 0.0, %v122
    %v124 = vpop.f32.mrf.mxu0
    %v125 = vadd.f32 0.0, %v124
    %v126 = vpop.f32.mrf.mxu0
    %v127 = vadd.f32 0.0, %v126
    %128 = vdwg.mxu0
    %129 = vmatprep.subr.bf16.mxu0 0
    %130 = vmatpush1.bf16.msra.mxu0 0
    %131 = vmatprep.subr.bf16.mxu0 0
    %132 = vmatpush1.bf16.msra.mxu0 0
    %133 = vmatprep.subr.bf16.mxu0 0
    %134 = vmatpush1.bf16.msra.mxu0 0
    %135 = vmatprep.subr.bf16.mxu0 0
    %136 = vmatpush1.bf16.msra.mxu0 0
    %137 = vmatprep.subr.bf16.mxu0 0
    %138 = vmatpush1.bf16.msra.mxu0 0
    %139 = vmatprep.subr.bf16.mxu0 0
    %140 = vmatpush1.bf16.msra.mxu0 0
    %141 = vmatprep.subr.bf16.mxu0 0
    %142 = vmatpush1.bf16.msra.mxu0 0
    %143 = vmatprep.subr.bf16.mxu0 0
    %144 = vmatpush1.bf16.msra.mxu0 %v68
    %145 = vmatprep.subr.bf16.mxu0 0
    %146 = vmatpush2.bf16.msra.mxu0 0
    %147 = vmatprep.subr.bf16.mxu0 0
    %148 = vmatpush2.bf16.msra.mxu0 0
    %149 = vmatprep.subr.bf16.mxu0 0
    %150 = vmatpush2.bf16.msra.mxu0 0
    %151 = vmatprep.subr.bf16.mxu0 0
    %152 = vmatpush2.bf16.msra.mxu0 0
    %153 = vmatprep.subr.bf16.mxu0 0
    %154 = vmatpush2.bf16.msra.mxu0 0
    %155 = vmatprep.subr.bf16.mxu0 0
    %156 = vmatpush2.bf16.msra.mxu0 0
    %157 = vmatprep.subr.bf16.mxu0 0
    %158 = vmatpush2.bf16.msra.mxu0 0
    %159 = vmatprep.subr.bf16.mxu0 0
    %160 = vmatpush2.bf16.msra.mxu0 0
    %161 = vmatprep.mubr.bf16.mxu0 0
    %162 = vmatmul.mubr.bf16.gmra.mxu0 %v71
    %v163 = vpop.f32.mrf.mxu0
    %v164 = vadd.f32 0.0, %v163
    %v165 = vpop.f32.mrf.mxu0
    %v166 = vpop.f32.mrf.mxu0
    %v167 = vadd.f32 0.0, %v166
    %v168 = vpop.f32.mrf.mxu0
    %169 = vmatprep.mubr.bf16.mxu0 0
    %170 = vmatmul.mubr.bf16.gmra.mxu0 %v74
    %v171 = vpop.f32.mrf.mxu0
    %v172 = vadd.f32 0.0, %v171
    %v173 = vpop.f32.mrf.mxu0
    %v174 = vpop.f32.mrf.mxu0
    %v175 = vadd.f32 0.0, %v174
    %v176 = vpop.f32.mrf.mxu0
    %177 = vdwg.mxu0
    %v178 = vadd.f32 %v42, 1.0
    %v179 = vadd.f32 %v43, 1.0
    %v180 = vadd.f32 %v44, 1.0
    %v181 = vadd.f32 %v45, 1.0
    %v182 = vadd.f32 %v46, 1.0
    %v183 = vadd.f32 %v47, 1.0
    %v184 = vadd.f32 %v48, 1.0
    %v185 = vadd.f32 %v49, 1.0
    %v186 = vadd.f32 %v50, 1.0
    %v187 = vadd.f32 %v51, 1.0
    %v188 = vadd.f32 %v52, 1.0
    %v189 = vadd.f32 %v53, 1.0
    %v190 = vmul.f32 %v178, 0.5
    %v191 = vmul.f32 %v179, 0.5
    %v192 = vmul.f32 %v180, 0.5
    %v193 = vmul.f32 %v181, 0.5
    %v194 = vmul.f32 %v182, 0.5
    %v195 = vmul.f32 %v183, 0.5
    %v196 = vmul.f32 %v184, 0.5
    %v197 = vmul.f32 %v185, 0.5
    %v198 = vmul.f32 %v186, 0.5
    %v199 = vmul.f32 %v187, 0.5
    %v200 = vmul.f32 %v188, 0.5
    %v201 = vmul.f32 %v189, 0.5
    %vm202 = vcmp.gt.f32.partialorder %v111, 0.0
    %vm203 = vcmp.gt.f32.partialorder %v113, 0.0
    %vm204 = vcmp.gt.f32.partialorder %v164, 0.0
    %vm205 = vcmp.gt.f32.partialorder %v115, 0.0
    %vm206 = vcmp.gt.f32.partialorder %v117, 0.0
    %vm207 = vcmp.gt.f32.partialorder %v167, 0.0
    %vm208 = vcmp.gt.f32.partialorder %v121, 0.0
    %vm209 = vcmp.gt.f32.partialorder %v123, 0.0
    %vm210 = vcmp.gt.f32.partialorder %v172, 0.0
    %vm211 = vcmp.gt.f32.partialorder %v125, 0.0
    %vm212 = vcmp.gt.f32.partialorder %v127, 0.0
    %vm213 = vcmp.gt.f32.partialorder %v175, 0.0
    %v214 = vsub.f32 1.0, %v190
    %v215 = vsub.f32 1.0, %v191
    %v216 = vsub.f32 1.0, %v192
    %v217 = vsub.f32 1.0, %v193
    %v218 = vsub.f32 1.0, %v194
    %v219 = vsub.f32 1.0, %v195
    %v220 = vsub.f32 1.0, %v196
    %v221 = vsub.f32 1.0, %v197
    %v222 = vsub.f32 1.0, %v198
    %v223 = vsub.f32 1.0, %v199
    %v224 = vsub.f32 1.0, %v200
    %v225 = vsub.f32 1.0, %v201
    %v226 = vsel %vm202, %v190, %v214
    %v227 = vsel %vm203, %v191, %v215
    %v228 = vsel %vm204, %v192, %v216
    %v229 = vsel %vm205, %v193, %v217
    %v230 = vsel %vm206, %v194, %v218
    %v231 = vsel %vm207, %v195, %v219
    %v232 = vsel %vm208, %v196, %v220
    %v233 = vsel %vm209, %v197, %v221
    %v234 = vsel %vm210, %v198, %v222
    %v235 = vsel %vm211, %v199, %v223
    %v236 = vsel %vm212, %v200, %v224
    %v237 = vsel %vm213, %v201, %v225
    %v238 = vlog2.pop %v226
    %v239 = vmul.f32 %v238, 0.6931472
    %v240 = vlog2.pop %v227
    %v241 = vmul.f32 %v240, 0.6931472
    %v242 = vlog2.pop %v228
    %v243 = vmul.f32 %v242, 0.6931472
    %v244 = vlog2.pop %v229
    %v245 = vmul.f32 %v244, 0.6931472
    %v246 = vlog2.pop %v230
    %v247 = vmul.f32 %v246, 0.6931472
    %v248 = vlog2.pop %v231
    %v249 = vmul.f32 %v248, 0.6931472
    %v250 = vlog2.pop %v232
    %v251 = vmul.f32 %v250, 0.6931472
    %v252 = vlog2.pop %v233
    %v253 = vmul.f32 %v252, 0.6931472
    %v254 = vlog2.pop %v234
    %v255 = vmul.f32 %v254, 0.6931472
    %v256 = vlog2.pop %v235
    %v257 = vmul.f32 %v256, 0.6931472
    %v258 = vlog2.pop %v236
    %v259 = vmul.f32 %v258, 0.6931472
    %v260 = vlog2.pop %v237
    %v261 = vmul.f32 %v260, 0.6931472
    %v262 = vmax.f32 %v239, -100.0
    %v263 = vmax.f32 %v241, -100.0
    %v264 = vmax.f32 %v243, -100.0
    %v265 = vmax.f32 %v245, -100.0
    %v266 = vmax.f32 %v247, -100.0
    %v267 = vmax.f32 %v249, -100.0
    %v268 = vmax.f32 %v251, -100.0
    %v269 = vmax.f32 %v253, -100.0
    %v270 = vmax.f32 %v255, -100.0
    %v271 = vmax.f32 %v257, -100.0
    %v272 = vmax.f32 %v259, -100.0
    %v273 = vmax.f32 %v261, -100.0
    %v274 = vsub.f32 0.0, %v262
    %v275 = vsub.f32 0.0, %v263
    %v276 = vsub.f32 0.0, %v264
    %v277 = vsub.f32 0.0, %v265
    %v278 = vsub.f32 0.0, %v266
    %v279 = vsub.f32 0.0, %v267
    %v280 = vsub.f32 0.0, %v268
    %v281 = vsub.f32 0.0, %v269
    %v282 = vsub.f32 0.0, %v270
    %v283 = vsub.f32 0.0, %v271
    %v284 = vsub.f32 0.0, %v272
    %v285 = vsub.f32 0.0, %v273
    %v286 = vand.u32 2147483647, %v42
    %v287 = vand.u32 2147483647, %v43
    %v288 = vand.u32 2147483647, %v44
    %v289 = vand.u32 2147483647, %v45
    %v290 = vand.u32 2147483647, %v46
    %v291 = vand.u32 2147483647, %v47
    %v292 = vand.u32 2147483647, %v48
    %v293 = vand.u32 2147483647, %v49
    %v294 = vand.u32 2147483647, %v50
    %v295 = vand.u32 2147483647, %v51
    %v296 = vand.u32 2147483647, %v52
    %v297 = vand.u32 2147483647, %v53
    %v298 = vsub.f32 %v286, 1.0
    %v299 = vsub.f32 %v287, 1.0
    %v300 = vsub.f32 %v288, 1.0
    %v301 = vsub.f32 %v289, 1.0
    %v302 = vsub.f32 %v290, 1.0
    %v303 = vsub.f32 %v291, 1.0
    %v304 = vsub.f32 %v292, 1.0
    %v305 = vsub.f32 %v293, 1.0
    %v306 = vsub.f32 %v294, 1.0
    %v307 = vsub.f32 %v295, 1.0
    %v308 = vsub.f32 %v296, 1.0
    %v309 = vsub.f32 %v297, 1.0
    %v310 = vmul.f32 %v298, %v298
    %v311 = vmul.f32 %v299, %v299
    %v312 = vmul.f32 %v300, %v300
    %v313 = vmul.f32 %v301, %v301
    %v314 = vmul.f32 %v302, %v302
    %v315 = vmul.f32 %v303, %v303
    %v316 = vmul.f32 %v304, %v304
    %v317 = vmul.f32 %v305, %v305
    %v318 = vmul.f32 %v306, %v306
    %v319 = vmul.f32 %v307, %v307
    %v320 = vmul.f32 %v308, %v308
    %v321 = vmul.f32 %v309, %v309
    %v322 = vmul.f32 %v310, 0.0001
    %v323 = vmul.f32 %v311, 0.0001
    %v324 = vmul.f32 %v312, 0.0001
    %v325 = vmul.f32 %v313, 0.0001
    %v326 = vmul.f32 %v314, 0.0001
    %v327 = vmul.f32 %v315, 0.0001
    %v328 = vmul.f32 %v316, 0.0001
    %v329 = vmul.f32 %v317, 0.0001
    %v330 = vmul.f32 %v318, 0.0001
    %v331 = vmul.f32 %v319, 0.0001
    %v332 = vmul.f32 %v320, 0.0001
    %v333 = vmul.f32 %v321, 0.0001
    %v334 = vadd.f32 %v274, %v322
    %v335 = vadd.f32 %v275, %v323
    %v336 = vadd.f32 %v276, %v324
    %v337 = vadd.f32 %v277, %v325
    %v338 = vadd.f32 %v278, %v326
    %v339 = vadd.f32 %v279, %v327
    %v340 = vadd.f32 %v280, %v328
    %v341 = vadd.f32 %v281, %v329
    %v342 = vadd.f32 %v282, %v330
    %v343 = vadd.f32 %v283, %v331
    %v344 = vadd.f32 %v284, %v332
    %v345 = vadd.f32 %v285, %v333
    %v346 = vadd.f32 %v334, %v337
    %v347 = vadd.f32 %v346, %v340
    %v348 = vadd.f32 %v347, %v343
    %v349 = vrot.slane %v348, 4
    %v350 = vadd.f32 %v348, %v349
    %v351 = vrot.slane %v350, 2
    %v352 = vadd.f32 %v350, %v351
    %v353 = vrot.slane %v352, 1
    %v354 = vadd.f32 %v352, %v353
    %v355 = vadd.f32 %v335, %v338
    %v356 = vadd.f32 %v355, %v341
    %v357 = vadd.f32 %v356, %v344
    %v358 = vrot.slane %v357, 4
    %v359 = vadd.f32 %v357, %v358
    %v360 = vrot.slane %v359, 2
    %v361 = vadd.f32 %v359, %v360
    %v362 = vrot.slane %v361, 1
    %v363 = vadd.f32 %v361, %v362
    %v364 = vadd.f32 %v336, %v339
    %v365 = vadd.f32 %v364, %v342
    %v366 = vadd.f32 %v365, %v345
    %v367 = vrot.slane %v366, 4
    %v368 = vadd.f32 %v366, %v367
    %v369 = vrot.slane %v368, 2
    %v370 = vadd.f32 %v368, %v369
    %v371 = vrot.slane %v370, 1
    %v372 = vadd.f32 %v370, %v371
    %s373 = smul.u32 0, 384
    %v374 = vlaneseq
    %v375 = vand.u32 %v374, 127
    %v376 = vadd.s32 %v375, 128
    %v377 = vadd.s32 %v375, 256
    %v378 = vstv %s373
    %v379 = vadd.s32 %v378, %v375
    %v380 = vadd.s32 %v378, %v376
    %v381 = vadd.s32 %v378, %v377
    %vm382 = vcmp.lt.s32.totalorder %v379, 300
    %vm383 = vcmp.lt.s32.totalorder %v380, 300
    %vm384 = vcmp.lt.s32.totalorder %v381, 300
    %v385 = vsel %vm382, %v354, 0.0
    %v386 = vsel %vm383, %v363, 0.0
    %v387 = vsel %vm384, %v372, 0.0
    %vm388 = vcmask 1040384
    %v389 = vsel %vm388, %v385, 0.0
    %v390 = vsel %vm388, %v386, 0.0
    %v391 = vadd.f32 %v389, %v390
    %v392 = vsel %vm388, %v387, 0.0
    %v393 = vadd.f32 %v391, %v392
    %394 = vadd.xlane.f32.xlu0 %v393
    %v395 = vpop.xlane.xlu0 %394
    %v396 = vrot.slane %v395, 4
    %v397 = vadd.f32 %v395, %v396
    %v398 = vrot.slane %v397, 2
    %v399 = vadd.f32 %v397, %v398
    %v400 = vrot.slane %v399, 1
    %v401 = vadd.f32 %v399, %v400
    %s402 = vtos %v401
    %v403 = vstv %s402
    %404 = vst [vmem:[#allocation5] sm:$0xff] %v403
    // Predicated region
    $region18: #{tpu_custom_call.1} parent=1 // pred_check
      _
    $region19: #{tpu_custom_call.1} parent=1 // pred_check_branch
      %406 = sbr.rel (0) target = $region21
    $region20: #{tpu_custom_call.1} parent=1 // pred_region
      %s408 = ssub.s32 128, 128
      %409 = vsyncadd [#allocation4], %s408
      %s411 = sshll.u32 [#allocation5], 4
      %s412 = int_to_ptr.vmem [resolvable:$true] %s411
      %414 = dma.vmem_to_hbm [thread:$0]  %s412, 128, %s3, [#allocation4]
    $region21: #{tpu_custom_call.1} parent=1 // pred_fallthru
      _
    // Predicated region
    $region22: #{tpu_custom_call.1} parent=1 // pred_check
      _
    $region23: #{tpu_custom_call.1} parent=1 // pred_check_branch
      %416 = sbr.rel (0) target = $region25
    $region24: #{tpu_custom_call.1} parent=1 // pred_region
      %417 = dma.done [#allocation4], 128
    $region25: #{tpu_custom_call.1} parent=1 // pred_fallthru
      _
    %418 = vsyncpa [#allocation3], 1
    %419 = vsyncpa [#allocation4], 1

</llo_original>
